<compile_context>
chip_gen: v5e
topology: v5e:2x2
jax: 0.10.0
libtpu: 0.0.40
codegen_flags: <defaults>
</compile_context>

<pallas_src>
import jax
import jax.numpy as jnp
from jax.experimental import pallas as pl
from jax.experimental.pallas import tpu as pltpu


def _round_up(n, m):
    return ((n + m - 1) // m) * m


def nest_mlp_kernel(x_ref, w1_ref, b1_ref, w2_ref, b2_ref, w3_ref, b3_ref, o_ref):
    # x_ref: (TILE_B, 20) in the caller's dtype; weights in compute_dtype;
    # biases in f32 shaped (1, F) for sublane broadcast.
    x = x_ref[...].astype(w1_ref.dtype)                          # (TB, 20)

    # Layer 1: Linear(20,64) + ReLU.  f32 MXU accumulation, f32 bias/ReLU.
    h1 = jnp.dot(x, w1_ref[...], preferred_element_type=jnp.float32)
    h1 = jnp.maximum(h1 + b1_ref[...], 0.0)                      # (TB, 64) f32

    # Layer 2: Linear(64,32) + ReLU.
    h2 = jnp.dot(h1.astype(w2_ref.dtype), w2_ref[...],
                 preferred_element_type=jnp.float32)
    h2 = jnp.maximum(h2 + b2_ref[...], 0.0)                      # (TB, 32) f32

    # Layer 3: Linear(32,16), no activation.
    out = jnp.dot(h2.astype(w3_ref.dtype), w3_ref[...],
                  preferred_element_type=jnp.float32)
    o_ref[...] = (out + b3_ref[...]).astype(o_ref.dtype)         # (TB, 16)


def nest_mlp(x, params, *, tile_b=4096, compute_dtype=jnp.bfloat16, out_dtype=None):
    """x: (B, 20) -> (B, 16). params as produced by init_params().

    x streams in its own dtype (pass bf16 for minimal HBM traffic); weights are
    cast once (tiny) to `compute_dtype`; accumulation/bias/ReLU stay f32.
    """
    w1, b1, w2, b2, w3, b3 = params
    B, f_in = x.shape
    assert f_in == 20, x.shape
    out_dtype = x.dtype if out_dtype is None else out_dtype
    tile_b = max(1, int(tile_b))

    # ---- batch tiling: natural (B, F) layout, no wrapper-side pad/transpose ----
    if B <= tile_b and B < 2048:
        # Single block == full array: no (8,128) divisibility requirements.
        n_tiles, tile = 1, B
    else:
        # >= 2 tiles once the batch is big enough so both v7x TCs get work.
        n_tiles = max(pl.cdiv(B, tile_b), 2)
        tile = _round_up(pl.cdiv(B, n_tiles), 128)   # sublane tile, 128-aligned
        n_tiles = pl.cdiv(B, tile)                   # last tile is clipped by Pallas

    # Tiny, one-time parameter casts (≈15 KiB total; stays VMEM-resident).
    w1c = w1.astype(compute_dtype)                   # (20, 64)
    w2c = w2.astype(compute_dtype)                   # (64, 32)
    w3c = w3.astype(compute_dtype)                   # (32, 16)
    b1c = b1.reshape(1, -1).astype(jnp.float32)      # (1, 64)
    b2c = b2.reshape(1, -1).astype(jnp.float32)      # (1, 32)
    b3c = b3.reshape(1, -1).astype(jnp.float32)      # (1, 16)

    def resident(shape):
        # Full-array block + constant block index -> fetched once, stays in VMEM.
        return pl.BlockSpec(shape, lambda i: (0, 0))

    x_itemsize = jnp.dtype(x.dtype).itemsize
    o_itemsize = jnp.dtype(out_dtype).itemsize
    p_itemsize = jnp.dtype(compute_dtype).itemsize
    param_bytes = (sum(int(p.size) * p_itemsize for p in (w1c, w2c, w3c))
                   + sum(int(p.size) * 4 for p in (b1c, b2c, b3c)))
    cost = pl.CostEstimate(
        flops=2 * B * (20 * 64 + 64 * 32 + 32 * 16),
        transcendentals=0,
        bytes_accessed=B * 20 * x_itemsize + B * 16 * o_itemsize + param_bytes,
    )

    out = pl.pallas_call(
        nest_mlp_kernel,
        out_shape=jax.ShapeDtypeStruct((B, 16), out_dtype),
        grid=(n_tiles,),
        in_specs=[
            pl.BlockSpec((tile, 20), lambda i: (i, 0)),   # x: streamed per tile
            resident((20, 64)), resident((1, 64)),
            resident((64, 32)), resident((1, 32)),
            resident((32, 16)), resident((1, 16)),
        ],
        out_specs=pl.BlockSpec((tile, 16), lambda i: (i, 0)),
        compiler_params=pltpu.CompilerParams(
            dimension_semantics=("parallel",),        # shard batch across TCs (v7x)
            vmem_limit_bytes=32 * 1024 * 1024,        # headroom for tile_b=4096 temps
        ),
        cost_estimate=cost,
    )(x, w1c, b1c, w2c, b2c, w3c, b3c)

    return out


def init_params(key):
    """Deterministic init mirroring PyTorch nn.Linear shapes.

    nn.Linear(in, out) -> weight (out, in), bias (out,). We store weights as
    (in, out) so the reference is x @ W + b (== PyTorch's x @ W.T + b).
    """
    k1, k2, k3, k4, k5, k6 = jax.random.split(key, 6)

    def uinit(k, shape, fan_in):
        bound = 1.0 / jnp.sqrt(fan_in)
        return jax.random.uniform(k, shape, jnp.float32, -bound, bound)

    w1 = uinit(k1, (20, 64), 20)
    b1 = uinit(k2, (64,), 20)
    w2 = uinit(k3, (64, 32), 64)
    b2 = uinit(k4, (32,), 64)
    w3 = uinit(k5, (32, 16), 32)
    b3 = uinit(k6, (16,), 32)
    return (w1, b1, w2, b2, w3, b3)


def nest_mlp_ref(x, params):
    """Pure-JAX reference of the PyTorch forward pass."""
    w1, b1, w2, b2, w3, b3 = params
    h1 = jnp.maximum(x @ w1 + b1, 0.0)
    h2 = jnp.maximum(h1 @ w2 + b2, 0.0)
    return h2 @ w3 + b3


if __name__ == "__main__":
    key = jax.random.PRNGKey(0)
    kx, kp = jax.random.split(key)
    params = init_params(kp)

    # f32 end-to-end, single-block path: tight check against the reference.
    B = 8
    x = jax.random.normal(kx, (B, 20), dtype=jnp.float32)
    out = jax.block_until_ready(nest_mlp(x, params, compute_dtype=jnp.float32))
    ref = nest_mlp_ref(x, params)
    assert out.shape == (B, 16), out.shape
    assert jnp.allclose(out, ref, atol=1e-5, rtol=1e-5), "mismatch vs reference (B=8, f32)"

    # Default bf16-at-HBM-boundary path exercising the multi-tile grid with a
    # clipped partial last tile (B=300, tile=128 -> grid=(3,)).
    B2 = 300
    x2 = jax.random.normal(kx, (B2, 20), dtype=jnp.float32).astype(jnp.bfloat16)
    out2 = jax.block_until_ready(nest_mlp(x2, params, tile_b=128))
    ref2 = nest_mlp_ref(x2.astype(jnp.float32), params)
    assert out2.shape == (B2, 16), out2.shape
    assert jnp.allclose(out2.astype(jnp.float32), ref2, atol=5e-2, rtol=5e-2), \
        "mismatch vs reference (B=300, bf16)"

    print("KERNEL_OK")
</pallas_src>

<mosaic_0001>
module attributes {stable_mosaic.version = 11 : i64} {
  func.func @nest_mlp_kernel(%arg0: i32, %arg1: memref<8x20xf32, #tpu.memory_space<vmem>>, %arg2: memref<20x64xf32, #tpu.memory_space<vmem>>, %arg3: memref<1x64xf32, #tpu.memory_space<vmem>>, %arg4: memref<64x32xf32, #tpu.memory_space<vmem>>, %arg5: memref<1x32xf32, #tpu.memory_space<vmem>>, %arg6: memref<32x16xf32, #tpu.memory_space<vmem>>, %arg7: memref<1x16xf32, #tpu.memory_space<vmem>>, %arg8: memref<8x16xf32, #tpu.memory_space<vmem>>) attributes {dimension_semantics = [#tpu.dimension_semantics<parallel>], iteration_bounds = array<i64: 1>, scalar_prefetch = 0 : i64, scratch_operands = 0 : i64, tpu.core_type = #tpu.core_type<tc>, window_params = [{transform_indices = @transform_0, window_bounds = array<i64: 8, 20>}, {pipeline_mode = #tpu.pipeline_mode<synchronous>, transform_indices = @transform_1, window_bounds = array<i64: 20, 64>}, {pipeline_mode = #tpu.pipeline_mode<synchronous>, transform_indices = @transform_2, window_bounds = array<i64: 1, 64>}, {pipeline_mode = #tpu.pipeline_mode<synchronous>, transform_indices = @transform_3, window_bounds = array<i64: 64, 32>}, {pipeline_mode = #tpu.pipeline_mode<synchronous>, transform_indices = @transform_4, window_bounds = array<i64: 1, 32>}, {pipeline_mode = #tpu.pipeline_mode<synchronous>, transform_indices = @transform_5, window_bounds = array<i64: 32, 16>}, {pipeline_mode = #tpu.pipeline_mode<synchronous>, transform_indices = @transform_6, window_bounds = array<i64: 1, 16>}, {transform_indices = @transform_7, window_bounds = array<i64: 8, 16>}]} {
    %c0 = arith.constant 0 : index
    %c0_0 = arith.constant 0 : index
    %0 = vector.load %arg1[%c0, %c0_0] : memref<8x20xf32, #tpu.memory_space<vmem>>, vector<8x20xf32>
    %c0_1 = arith.constant 0 : index
    %c0_2 = arith.constant 0 : index
    %1 = vector.load %arg2[%c0_1, %c0_2] : memref<20x64xf32, #tpu.memory_space<vmem>>, vector<20x64xf32>
    %cst = arith.constant dense<0.000000e+00> : vector<8x64xf32>
    %2 = tpu.matmul %0, %1, %cst {dimension_numbers = #tpu.dot_dimension_numbers<[1], [0], [0], [1], [0, 0, 1, 1], [], []>} : vector<8x20xf32>, vector<20x64xf32>, vector<8x64xf32> -> vector<8x64xf32>
    %c0_3 = arith.constant 0 : index
    %c0_4 = arith.constant 0 : index
    %3 = vector.load %arg3[%c0_3, %c0_4] : memref<1x64xf32, #tpu.memory_space<vmem>>, vector<1x64xf32>
    %4 = vector.broadcast %3 : vector<1x64xf32> to vector<8x64xf32>
    %5 = arith.addf %2, %4 : vector<8x64xf32>
    %cst_5 = arith.constant 0.000000e+00 : f32
    %6 = vector.broadcast %cst_5 : f32 to vector<8x64xf32>
    %7 = arith.maximumf %5, %6 : vector<8x64xf32>
    %c0_6 = arith.constant 0 : index
    %c0_7 = arith.constant 0 : index
    %8 = vector.load %arg4[%c0_6, %c0_7] : memref<64x32xf32, #tpu.memory_space<vmem>>, vector<64x32xf32>
    %cst_8 = arith.constant dense<0.000000e+00> : vector<8x32xf32>
    %9 = tpu.matmul %7, %8, %cst_8 {dimension_numbers = #tpu.dot_dimension_numbers<[1], [0], [0], [1], [0, 0, 1, 1], [], []>} : vector<8x64xf32>, vector<64x32xf32>, vector<8x32xf32> -> vector<8x32xf32>
    %c0_9 = arith.constant 0 : index
    %c0_10 = arith.constant 0 : index
    %10 = vector.load %arg5[%c0_9, %c0_10] : memref<1x32xf32, #tpu.memory_space<vmem>>, vector<1x32xf32>
    %11 = vector.broadcast %10 : vector<1x32xf32> to vector<8x32xf32>
    %12 = arith.addf %9, %11 : vector<8x32xf32>
    %cst_11 = arith.constant 0.000000e+00 : f32
    %13 = vector.broadcast %cst_11 : f32 to vector<8x32xf32>
    %14 = arith.maximumf %12, %13 : vector<8x32xf32>
    %c0_12 = arith.constant 0 : index
    %c0_13 = arith.constant 0 : index
    %15 = vector.load %arg6[%c0_12, %c0_13] : memref<32x16xf32, #tpu.memory_space<vmem>>, vector<32x16xf32>
    %cst_14 = arith.constant dense<0.000000e+00> : vector<8x16xf32>
    %16 = tpu.matmul %14, %15, %cst_14 {dimension_numbers = #tpu.dot_dimension_numbers<[1], [0], [0], [1], [0, 0, 1, 1], [], []>} : vector<8x32xf32>, vector<32x16xf32>, vector<8x16xf32> -> vector<8x16xf32>
    %c0_15 = arith.constant 0 : index
    %c0_16 = arith.constant 0 : index
    %17 = vector.load %arg7[%c0_15, %c0_16] : memref<1x16xf32, #tpu.memory_space<vmem>>, vector<1x16xf32>
    %18 = vector.broadcast %17 : vector<1x16xf32> to vector<8x16xf32>
    %19 = arith.addf %16, %18 : vector<8x16xf32>
    %c0_17 = arith.constant 0 : index
    %c0_18 = arith.constant 0 : index
    %20 = vector.load %arg8[%c0_17, %c0_18] : memref<8x16xf32, #tpu.memory_space<vmem>>, vector<8x16xf32>
    tpu.vector_store %arg8[%c0_17, %c0_18], %19 {strides = array<i32>} : memref<8x16xf32, #tpu.memory_space<vmem>>, vector<8x16xf32>,
    return
  }
  func.func @transform_0(%arg0: i32) -> (i32, i32) {
    %c0_i32 = arith.constant 0 : i32
    %c0_i32_0 = arith.constant 0 : i32
    return %arg0, %c0_i32 : i32, i32
  }
  func.func @transform_1(%arg0: i32) -> (i32, i32) {
    %c0_i32 = arith.constant 0 : i32
    %c0_i32_0 = arith.constant 0 : i32
    %c0_i32_1 = arith.constant 0 : i32
    return %c0_i32, %c0_i32_0 : i32, i32
  }
  func.func @transform_2(%arg0: i32) -> (i32, i32) {
    %c0_i32 = arith.constant 0 : i32
    %c0_i32_0 = arith.constant 0 : i32
    %c0_i32_1 = arith.constant 0 : i32
    return %c0_i32, %c0_i32_0 : i32, i32
  }
  func.func @transform_3(%arg0: i32) -> (i32, i32) {
    %c0_i32 = arith.constant 0 : i32
    %c0_i32_0 = arith.constant 0 : i32
    %c0_i32_1 = arith.constant 0 : i32
    return %c0_i32, %c0_i32_0 : i32, i32
  }
  func.func @transform_4(%arg0: i32) -> (i32, i32) {
    %c0_i32 = arith.constant 0 : i32
    %c0_i32_0 = arith.constant 0 : i32
    %c0_i32_1 = arith.constant 0 : i32
    return %c0_i32, %c0_i32_0 : i32, i32
  }
  func.func @transform_5(%arg0: i32) -> (i32, i32) {
    %c0_i32 = arith.constant 0 : i32
    %c0_i32_0 = arith.constant 0 : i32
    %c0_i32_1 = arith.constant 0 : i32
    return %c0_i32, %c0_i32_0 : i32, i32
  }
  func.func @transform_6(%arg0: i32) -> (i32, i32) {
    %c0_i32 = arith.constant 0 : i32
    %c0_i32_0 = arith.constant 0 : i32
    %c0_i32_1 = arith.constant 0 : i32
    return %c0_i32, %c0_i32_0 : i32, i32
  }
  func.func @transform_7(%arg0: i32) -> (i32, i32) {
    %c0_i32 = arith.constant 0 : i32
    %c0_i32_0 = arith.constant 0 : i32
    return %arg0, %c0_i32 : i32, i32
  }
}

</mosaic_0001>

<llo_original>
// kernel: tpu_custom_call.1
$region0: #{tpu_custom_call.1}
  #allocation0 [shape = 'u32[]', space=smem, size = 0x4, offset = 0x4, fixed_abs, tag = 'smem constant byte address 0x4 - core index']
  #allocation1 [shape = 'u32[72,128]{1,0:T(1,128)}', space=vmem, size = 0x9000, scoped, tag = 'internal scratch']
  %s0 = inlined_call_operand.vmem [shape: f32[8,20], index: 0, kind: input, shape index: {}]
  %s1 = inlined_call_operand.vmem [shape: f32[20,64], index: 1, kind: input, shape index: {}]
  %s2 = inlined_call_operand.vmem [shape: f32[1,64], index: 2, kind: input, shape index: {}]
  %s3 = inlined_call_operand.vmem [shape: f32[64,32], index: 3, kind: input, shape index: {}]
  %s4 = inlined_call_operand.vmem [shape: f32[1,32], index: 4, kind: input, shape index: {}]
  %s5 = inlined_call_operand.vmem [shape: f32[32,16], index: 5, kind: input, shape index: {}]
  %s6 = inlined_call_operand.vmem [shape: f32[1,16], index: 6, kind: input, shape index: {}]
  %s7 = inlined_call_operand.hbm [shape: f32[8,16], index: 7, kind: output, shape index: {}]
  %s8 = sld [smem:[#allocation0]]
  $region38: #{tpu_custom_call.1} parent=0
    _
  %s10 = ssub.s32 1, %s8
  %s11 = scalar_select 0, %s10, %s8
  $region1: #{tpu_custom_call.1} parent=0
    #allocation2 [shape = 'u8[4096]{0}', space=vmem, size = 0x1000, scoped, tag = 'output window, operand 0, single buffered']
    #allocation3 [shape = 's32[1]{0}', space=sflag, size = 0x4, scoped, tag = 'scoped memory for tpu_custom_call.1']
    %12 = vsyncpa [#allocation3], 0
    // Predicated region
    $region2: #{tpu_custom_call.1} parent=1 // pred_check
      _
    $region3: #{tpu_custom_call.1} parent=1 // pred_check_branch
      %14 = sbr.rel (0) target = $region5
    $region4: #{tpu_custom_call.1} parent=1 // pred_region
      _
    $region5: #{tpu_custom_call.1} parent=1 // pred_fallthru
      _
    // Predicated region
    $region6: #{tpu_custom_call.1} parent=1 // pred_check
      _
    $region7: #{tpu_custom_call.1} parent=1 // pred_check_branch
      %16 = sbr.rel (0) target = $region9
    $region8: #{tpu_custom_call.1} parent=1 // pred_region
      _
    $region9: #{tpu_custom_call.1} parent=1 // pred_fallthru
      _
    // Predicated region
    $region10: #{tpu_custom_call.1} parent=1 // pred_check
      _
    $region11: #{tpu_custom_call.1} parent=1 // pred_check_branch
      %18 = sbr.rel (0) target = $region13
    $region12: #{tpu_custom_call.1} parent=1 // pred_region
      _
    $region13: #{tpu_custom_call.1} parent=1 // pred_fallthru
      _
    // Predicated region
    $region14: #{tpu_custom_call.1} parent=1 // pred_check
      _
    $region15: #{tpu_custom_call.1} parent=1 // pred_check_branch
      %20 = sbr.rel (0) target = $region17
    $region16: #{tpu_custom_call.1} parent=1 // pred_region
      _
    $region17: #{tpu_custom_call.1} parent=1 // pred_fallthru
      _
    // Predicated region
    $region18: #{tpu_custom_call.1} parent=1 // pred_check
      _
    $region19: #{tpu_custom_call.1} parent=1 // pred_check_branch
      %22 = sbr.rel (0) target = $region21
    $region20: #{tpu_custom_call.1} parent=1 // pred_region
      _
    $region21: #{tpu_custom_call.1} parent=1 // pred_fallthru
      _
    // Predicated region
    $region22: #{tpu_custom_call.1} parent=1 // pred_check
      _
    $region23: #{tpu_custom_call.1} parent=1 // pred_check_branch
      %24 = sbr.rel (0) target = $region25
    $region24: #{tpu_custom_call.1} parent=1 // pred_region
      _
    $region25: #{tpu_custom_call.1} parent=1 // pred_fallthru
      _
    // Predicated region
    $region26: #{tpu_custom_call.1} parent=1 // pred_check
      _
    $region27: #{tpu_custom_call.1} parent=1 // pred_check_branch
      %26 = sbr.rel (0) target = $region29
    $region28: #{tpu_custom_call.1} parent=1 // pred_region
      _
    $region29: #{tpu_custom_call.1} parent=1 // pred_fallthru
      _
    %v27 = vld [vmem:[%s0] sm:$0xff]
    %v28 = vld [vmem:[%s1] sm:$0xff]
    %v29 = vld [vmem:[%s1 + $0x8] sm:$0xff]
    %v30 = vld [vmem:[%s1 + $0x10] sm:$0xf]
    %v31 = vld [vmem:[%s2] sm:$0x1]
    %v33 = vperm.slane %v31, 0
    %vm35 = vcmask 162816
    %v37 = vsel %vm35, %v27, 0
    %vm39 = vcmask 1043456
    %v41 = vsel %vm39, %v30, 0
    %43 = vmatpush.msra.mxu0 0.0
    %44 = vmatpush.msra.mxu0 0.0
    %45 = vmatpush.msra.mxu0 0.0
    %46 = vmatpush.msra.mxu0 0.0
    %47 = vmatpush.msra.mxu0 0.0
    %48 = vmatpush.msra.mxu0 0.0
    %49 = vmatpush.msra.mxu0 0.0
    %50 = vmatpush.msra.mxu0 0.0
    %51 = vmatpush.msra.mxu0 0.0
    %52 = vmatpush.msra.mxu0 0.0
    %53 = vmatpush.msra.mxu0 0.0
    %54 = vmatpush.msra.mxu0 0.0
    %55 = vmatpush.msra.mxu0 0.0
    %56 = vmatpush.msra.mxu0 %v41
    %57 = vmatpush.msra.mxu0 %v29
    %58 = vmatpush.msra.mxu0 %v28
    %59 = vmatmul.f32.gmra.mxu0 %v37
    %v60 = vpop.f32.mrf.mxu0
    %v61 = vadd.f32 %v33, %v60
    %62 = vdwg.mxu0
    %v63 = vmax.f32 %v61, 0.0
    %v64 = vld [vmem:[%s3] sm:$0xff]
    %v65 = vld [vmem:[%s3 + $0x8] sm:$0xff]
    %v66 = vld [vmem:[%s3 + $0x10] sm:$0xff]
    %v67 = vld [vmem:[%s3 + $0x18] sm:$0xff]
    %v68 = vld [vmem:[%s3 + $0x20] sm:$0xff]
    %v69 = vld [vmem:[%s3 + $0x28] sm:$0xff]
    %v70 = vld [vmem:[%s3 + $0x30] sm:$0xff]
    %v71 = vld [vmem:[%s3 + $0x38] sm:$0xff]
    %v72 = vld [vmem:[%s4] sm:$0x1]
    %v74 = vperm.slane %v72, 0
    %vm76 = vcmask 523264
    %v78 = vsel %vm76, %v63, 0
    %80 = vmatpush.msra.mxu0 0.0
    %81 = vmatpush.msra.mxu0 0.0
    %82 = vmatpush.msra.mxu0 0.0
    %83 = vmatpush.msra.mxu0 0.0
    %84 = vmatpush.msra.mxu0 0.0
    %85 = vmatpush.msra.mxu0 0.0
    %86 = vmatpush.msra.mxu0 0.0
    %87 = vmatpush.msra.mxu0 0.0
    %88 = vmatpush.msra.mxu0 %v71
    %89 = vmatpush.msra.mxu0 %v70
    %90 = vmatpush.msra.mxu0 %v69
    %91 = vmatpush.msra.mxu0 %v68
    %92 = vmatpush.msra.mxu0 %v67
    %93 = vmatpush.msra.mxu0 %v66
    %94 = vmatpush.msra.mxu0 %v65
    %95 = vmatpush.msra.mxu0 %v64
    %96 = vmatmul.f32.gmra.mxu0 %v78
    %v97 = vpop.f32.mrf.mxu0
    %v98 = vadd.f32 %v74, %v97
    %99 = vdwg.mxu0
    %v100 = vmax.f32 %v98, 0.0
    %v101 = vld [vmem:[%s5] sm:$0xff]
    %v102 = vld [vmem:[%s5 + $0x8] sm:$0xff]
    %v103 = vld [vmem:[%s5 + $0x10] sm:$0xff]
    %v104 = vld [vmem:[%s5 + $0x18] sm:$0xff]
    %v105 = vld [vmem:[%s6] sm:$0x1]
    %v107 = vperm.slane %v105, 0
    %vm109 = vcmask 261120
    %v111 = vsel %vm109, %v100, 0
    %113 = vmatpush.msra.mxu0 0.0
    %114 = vmatpush.msra.mxu0 0.0
    %115 = vmatpush.msra.mxu0 0.0
    %116 = vmatpush.msra.mxu0 0.0
    %117 = vmatpush.msra.mxu0 0.0
    %118 = vmatpush.msra.mxu0 0.0
    %119 = vmatpush.msra.mxu0 0.0
    %120 = vmatpush.msra.mxu0 0.0
    %121 = vmatpush.msra.mxu0 0.0
    %122 = vmatpush.msra.mxu0 0.0
    %123 = vmatpush.msra.mxu0 0.0
    %124 = vmatpush.msra.mxu0 0.0
    %125 = vmatpush.msra.mxu0 %v104
    %126 = vmatpush.msra.mxu0 %v103
    %127 = vmatpush.msra.mxu0 %v102
    %128 = vmatpush.msra.mxu0 %v101
    %129 = vmatmul.f32.gmra.mxu0 %v111
    %v130 = vpop.f32.mrf.mxu0
    %v131 = vadd.f32 %v107, %v130
    %132 = vdwg.mxu0
    %vm133 = vcmask 130048
    %134 = vst.msk [vmem:[#allocation2] sm:$0xff] %vm133, %v131
    // Predicated region
    $region30: #{tpu_custom_call.1} parent=1 // pred_check
      _
    $region31: #{tpu_custom_call.1} parent=1 // pred_check_branch
      %136 = sbr.rel (0) target = $region33
    $region32: #{tpu_custom_call.1} parent=1 // pred_region
      %138 = vsyncadd [#allocation3], 0
      %s140 = sshll.u32 [#allocation2], 4
      %s141 = int_to_ptr.vmem [resolvable:$true] %s140
      %s142 = sshll.u32 %s7, 4
      %s143 = int_to_ptr.hbm [resolvable:$true] %s142
      %145 = dma.vmem_to_hbm [thread:$0]  %s141, 128, %s143, [#allocation3]
    $region33: #{tpu_custom_call.1} parent=1 // pred_fallthru
      _
    // Predicated region
    $region34: #{tpu_custom_call.1} parent=1 // pred_check
      _
    $region35: #{tpu_custom_call.1} parent=1 // pred_check_branch
      %147 = sbr.rel (0) target = $region37
    $region36: #{tpu_custom_call.1} parent=1 // pred_region
      %149 = dma.done [#allocation3], 128
    $region37: #{tpu_custom_call.1} parent=1 // pred_fallthru
      _
    %150 = vsyncpa [#allocation3], 1

</llo_original>
